<compile_context>
chip_gen: v7x
topology: tpu7x:2x2x1
jax: 0.10.0
libtpu: 0.0.40
codegen_flags: <defaults>
</compile_context>

<pallas_src>
import functools

import jax
import jax.numpy as jnp
from jax.experimental import pallas as pl
from jax.experimental.pallas import tpu as pltpu

DIMS = (12, 12, 8, 5, 1)         # layer widths: in -> 12 -> 8 -> 5 -> 1
N_LAYERS = len(DIMS) - 1
PAD_F = 16                       # padded feature width (>= max layer width, multiple of 8)
SUB = 8                          # f32 sublane granularity


def _mlp_kernel(x_ref, w_ref, b_ref, o_ref):
    """Forward pass for one (tb, PAD_F) batch tile; weights resident in VMEM.

    x_ref: (tb, 16)   w_ref: (4, 16, 16)   b_ref: (4, 1, 16)   o_ref: (tb, 1)
    Zero-padded weight rows/cols and zero bias lanes keep the padded
    activation lanes at exactly 0 through every ReLU, so only lane 0 of the
    final layer carries real data.
    """
    h = x_ref[...]                                            # (tb, 16) f32
    for l in range(N_LAYERS):                                 # unrolled, 4 layers
        h = jnp.dot(h, w_ref[l], preferred_element_type=jnp.float32) + b_ref[l]
        if l < N_LAYERS - 1:
            h = jnp.maximum(h, 0.0)                           # ReLU
    o_ref[...] = jax.nn.sigmoid(h[:, :1])                     # write only the real column


def _ceil_to(n, m):
    return ((n + m - 1) // m) * m


def _pad2d(a, rows, cols):
    r, c = a.shape
    return jnp.pad(a, ((0, rows - r), (0, cols - c)))


@functools.partial(jax.jit, static_argnames=("tile_b",))
def predictor_binary_forward(x, params, *, tile_b=4096):
    """x: (B, 12) float.  params: list of (W, b) with W stored (in, out)."""
    B, F = x.shape
    assert F == DIMS[0]

    tb = _ceil_to(min(tile_b, _ceil_to(B, SUB)), SUB)
    Bp = _ceil_to(B, tb)

    # Narrow host-side padding: (Bp, 16), not (Bp, 128).
    x_p = _pad2d(x.astype(jnp.float32), Bp, PAD_F)

    # Stack all weights / biases into two tiny arrays (zero-padded to 16x16).
    w_stack = jnp.stack(
        [_pad2d(w.astype(jnp.float32), PAD_F, PAD_F) for (w, _) in params])          # (4, 16, 16)
    b_stack = jnp.stack(
        [_pad2d(b.reshape(1, -1).astype(jnp.float32), 1, PAD_F) for (_, b) in params])  # (4, 1, 16)

    grid = (Bp // tb,)
    out = pl.pallas_call(
        _mlp_kernel,
        out_shape=jax.ShapeDtypeStruct((Bp, 1), jnp.float32),
        grid=grid,
        in_specs=[
            pl.BlockSpec((tb, PAD_F), lambda i: (i, 0)),                  # batch-tiled x
            pl.BlockSpec((N_LAYERS, PAD_F, PAD_F), lambda i: (0, 0, 0)),  # resident weights
            pl.BlockSpec((N_LAYERS, 1, PAD_F), lambda i: (0, 0, 0)),      # resident biases
        ],
        out_specs=pl.BlockSpec((tb, 1), lambda i: (i, 0)),
        compiler_params=pltpu.CompilerParams(
            dimension_semantics=("parallel",)),   # shards batch tiles across TCs on v7x
    )(x_p, w_stack, b_stack)

    return out[:B]   # (B, 1)


def init_params(key):
    """Deterministic init matching the module's layer shapes (W stored (in, out))."""
    params = []
    for i in range(N_LAYERS):
        fan_in, fan_out = DIMS[i], DIMS[i + 1]
        key, kw, kb = jax.random.split(key, 3)
        bound = 1.0 / jnp.sqrt(fan_in)
        w = jax.random.uniform(kw, (fan_in, fan_out), jnp.float32, -bound, bound)
        b = jax.random.uniform(kb, (fan_out,), jnp.float32, -bound, bound)
        params.append((w, b))
    return params


def reference_forward(x, params):
    h = x.astype(jnp.float32)
    for i, (w, b) in enumerate(params):
        h = h @ w + b
        if i < len(params) - 1:
            h = jnp.maximum(h, 0.0)
    return jax.nn.sigmoid(h)


if __name__ == "__main__":
    key = jax.random.PRNGKey(0)
    key, kx = jax.random.split(key)

    B = 8
    x = jax.random.normal(kx, (B, 12), jnp.float32)
    params = init_params(key)

    out = predictor_binary_forward(x, params)
    out = jax.block_until_ready(out)

    ref = reference_forward(x, params)
    assert out.shape == (B, 1), out.shape
    assert jnp.allclose(out, ref, atol=1e-5, rtol=1e-5), (out, ref)

    print("KERNEL_OK")
</pallas_src>

<mosaic_0001>
module attributes {stable_mosaic.version = 11 : i64} {
  func.func @_mlp_kernel(%arg0: i32, %arg1: memref<8x16xf32, #tpu.memory_space<vmem>>, %arg2: memref<4x16x16xf32, #tpu.memory_space<vmem>>, %arg3: memref<4x1x16xf32, #tpu.memory_space<vmem>>, %arg4: memref<8x1xf32, #tpu.memory_space<vmem>>) attributes {dimension_semantics = [#tpu.dimension_semantics<parallel>], iteration_bounds = array<i64: 1>, scalar_prefetch = 0 : i64, scratch_operands = 0 : i64, tpu.core_type = #tpu.core_type<tc>, window_params = [{transform_indices = @transform_0, window_bounds = array<i64: 8, 16>}, {pipeline_mode = #tpu.pipeline_mode<synchronous>, transform_indices = @transform_1, window_bounds = array<i64: 4, 16, 16>}, {pipeline_mode = #tpu.pipeline_mode<synchronous>, transform_indices = @transform_2, window_bounds = array<i64: 4, 1, 16>}, {transform_indices = @transform_3, window_bounds = array<i64: 8, 1>}]} {
    %c0 = arith.constant 0 : index
    %c0_0 = arith.constant 0 : index
    %0 = vector.load %arg1[%c0, %c0_0] : memref<8x16xf32, #tpu.memory_space<vmem>>, vector<8x16xf32>
    %c0_1 = arith.constant 0 : index
    %c0_2 = arith.constant 0 : index
    %c0_3 = arith.constant 0 : index
    %1 = vector.load %arg2[%c0_1, %c0_2, %c0_3] : memref<4x16x16xf32, #tpu.memory_space<vmem>>, vector<1x16x16xf32>
    %2 = vector.shape_cast %1 : vector<1x16x16xf32> to vector<16x16xf32>
    %cst = arith.constant dense<0.000000e+00> : vector<8x16xf32>
    %3 = tpu.matmul %0, %2, %cst {dimension_numbers = #tpu.dot_dimension_numbers<[1], [0], [0], [1], [0, 0, 1, 1], [], []>} : vector<8x16xf32>, vector<16x16xf32>, vector<8x16xf32> -> vector<8x16xf32>
    %c0_4 = arith.constant 0 : index
    %c0_5 = arith.constant 0 : index
    %c0_6 = arith.constant 0 : index
    %4 = vector.load %arg3[%c0_4, %c0_5, %c0_6] : memref<4x1x16xf32, #tpu.memory_space<vmem>>, vector<1x1x16xf32>
    %5 = vector.shape_cast %4 : vector<1x1x16xf32> to vector<1x16xf32>
    %6 = vector.broadcast %5 : vector<1x16xf32> to vector<8x16xf32>
    %7 = arith.addf %3, %6 : vector<8x16xf32>
    %cst_7 = arith.constant 0.000000e+00 : f32
    %8 = vector.broadcast %cst_7 : f32 to vector<8x16xf32>
    %9 = arith.maximumf %7, %8 : vector<8x16xf32>
    %c1 = arith.constant 1 : index
    %c0_8 = arith.constant 0 : index
    %c0_9 = arith.constant 0 : index
    %10 = vector.load %arg2[%c1, %c0_8, %c0_9] : memref<4x16x16xf32, #tpu.memory_space<vmem>>, vector<1x16x16xf32>
    %11 = vector.shape_cast %10 : vector<1x16x16xf32> to vector<16x16xf32>
    %cst_10 = arith.constant dense<0.000000e+00> : vector<8x16xf32>
    %12 = tpu.matmul %9, %11, %cst_10 {dimension_numbers = #tpu.dot_dimension_numbers<[1], [0], [0], [1], [0, 0, 1, 1], [], []>} : vector<8x16xf32>, vector<16x16xf32>, vector<8x16xf32> -> vector<8x16xf32>
    %c1_11 = arith.constant 1 : index
    %c0_12 = arith.constant 0 : index
    %c0_13 = arith.constant 0 : index
    %13 = vector.load %arg3[%c1_11, %c0_12, %c0_13] : memref<4x1x16xf32, #tpu.memory_space<vmem>>, vector<1x1x16xf32>
    %14 = vector.shape_cast %13 : vector<1x1x16xf32> to vector<1x16xf32>
    %15 = vector.broadcast %14 : vector<1x16xf32> to vector<8x16xf32>
    %16 = arith.addf %12, %15 : vector<8x16xf32>
    %cst_14 = arith.constant 0.000000e+00 : f32
    %17 = vector.broadcast %cst_14 : f32 to vector<8x16xf32>
    %18 = arith.maximumf %16, %17 : vector<8x16xf32>
    %c2 = arith.constant 2 : index
    %c0_15 = arith.constant 0 : index
    %c0_16 = arith.constant 0 : index
    %19 = vector.load %arg2[%c2, %c0_15, %c0_16] : memref<4x16x16xf32, #tpu.memory_space<vmem>>, vector<1x16x16xf32>
    %20 = vector.shape_cast %19 : vector<1x16x16xf32> to vector<16x16xf32>
    %cst_17 = arith.constant dense<0.000000e+00> : vector<8x16xf32>
    %21 = tpu.matmul %18, %20, %cst_17 {dimension_numbers = #tpu.dot_dimension_numbers<[1], [0], [0], [1], [0, 0, 1, 1], [], []>} : vector<8x16xf32>, vector<16x16xf32>, vector<8x16xf32> -> vector<8x16xf32>
    %c2_18 = arith.constant 2 : index
    %c0_19 = arith.constant 0 : index
    %c0_20 = arith.constant 0 : index
    %22 = vector.load %arg3[%c2_18, %c0_19, %c0_20] : memref<4x1x16xf32, #tpu.memory_space<vmem>>, vector<1x1x16xf32>
    %23 = vector.shape_cast %22 : vector<1x1x16xf32> to vector<1x16xf32>
    %24 = vector.broadcast %23 : vector<1x16xf32> to vector<8x16xf32>
    %25 = arith.addf %21, %24 : vector<8x16xf32>
    %cst_21 = arith.constant 0.000000e+00 : f32
    %26 = vector.broadcast %cst_21 : f32 to vector<8x16xf32>
    %27 = arith.maximumf %25, %26 : vector<8x16xf32>
    %c3 = arith.constant 3 : index
    %c0_22 = arith.constant 0 : index
    %c0_23 = arith.constant 0 : index
    %28 = vector.load %arg2[%c3, %c0_22, %c0_23] : memref<4x16x16xf32, #tpu.memory_space<vmem>>, vector<1x16x16xf32>
    %29 = vector.shape_cast %28 : vector<1x16x16xf32> to vector<16x16xf32>
    %cst_24 = arith.constant dense<0.000000e+00> : vector<8x16xf32>
    %30 = tpu.matmul %27, %29, %cst_24 {dimension_numbers = #tpu.dot_dimension_numbers<[1], [0], [0], [1], [0, 0, 1, 1], [], []>} : vector<8x16xf32>, vector<16x16xf32>, vector<8x16xf32> -> vector<8x16xf32>
    %c3_25 = arith.constant 3 : index
    %c0_26 = arith.constant 0 : index
    %c0_27 = arith.constant 0 : index
    %31 = vector.load %arg3[%c3_25, %c0_26, %c0_27] : memref<4x1x16xf32, #tpu.memory_space<vmem>>, vector<1x1x16xf32>
    %32 = vector.shape_cast %31 : vector<1x1x16xf32> to vector<1x16xf32>
    %33 = vector.broadcast %32 : vector<1x16xf32> to vector<8x16xf32>
    %34 = arith.addf %30, %33 : vector<8x16xf32>
    %35 = vector.extract_strided_slice %34 {offsets = [0, 0], sizes = [8, 1], strides = [1, 1]} : vector<8x16xf32> to vector<8x1xf32>
    %36 = arith.negf %35 : vector<8x1xf32>
    %37 = math.exp %36 : vector<8x1xf32>
    %cst_28 = arith.constant 1.000000e+00 : f32
    %38 = vector.broadcast %cst_28 : f32 to vector<8x1xf32>
    %39 = arith.addf %38, %37 : vector<8x1xf32>
    %40 = arith.divf %38, %39 : vector<8x1xf32>
    %c0_29 = arith.constant 0 : index
    %c0_30 = arith.constant 0 : index
    %41 = vector.load %arg4[%c0_29, %c0_30] : memref<8x1xf32, #tpu.memory_space<vmem>>, vector<8x1xf32>
    tpu.vector_store %arg4[%c0_29, %c0_30], %40 {strides = array<i32>} : memref<8x1xf32, #tpu.memory_space<vmem>>, vector<8x1xf32>,
    return
  }
  func.func @transform_0(%arg0: i32) -> (i32, i32) {
    %c0_i32 = arith.constant 0 : i32
    %c0_i32_0 = arith.constant 0 : i32
    return %arg0, %c0_i32 : i32, i32
  }
  func.func @transform_1(%arg0: i32) -> (i32, i32, i32) {
    %c0_i32 = arith.constant 0 : i32
    %c0_i32_0 = arith.constant 0 : i32
    %c0_i32_1 = arith.constant 0 : i32
    %c0_i32_2 = arith.constant 0 : i32
    return %c0_i32, %c0_i32_0, %c0_i32_1 : i32, i32, i32
  }
  func.func @transform_2(%arg0: i32) -> (i32, i32, i32) {
    %c0_i32 = arith.constant 0 : i32
    %c0_i32_0 = arith.constant 0 : i32
    %c0_i32_1 = arith.constant 0 : i32
    %c0_i32_2 = arith.constant 0 : i32
    return %c0_i32, %c0_i32_0, %c0_i32_1 : i32, i32, i32
  }
  func.func @transform_3(%arg0: i32) -> (i32, i32) {
    %c0_i32 = arith.constant 0 : i32
    %c0_i32_0 = arith.constant 0 : i32
    return %arg0, %c0_i32 : i32, i32
  }
}

</mosaic_0001>

<llo_original>
// kernel: predictor_binary_forward.1
$region0: #{predictor_binary_forward.1}
  #allocation0 [shape = 'u32[]', space=smem, size = 0x4, offset = 0x4, fixed_abs, tag = 'smem constant byte address 0x4 - core index']
  #allocation1 [shape = 'u32[144,128]{1,0:T(1,128)}', space=vmem, size = 0x12000, scoped, tag = 'internal scratch']
  %s0 = inlined_call_operand.vmem [shape: f32[8,16], index: 0, kind: input, shape index: {}]
  %s1 = inlined_call_operand.vmem [shape: f32[4,16,16], index: 1, kind: input, shape index: {}]
  %s2 = inlined_call_operand.vmem [shape: f32[4,1,16], index: 2, kind: input, shape index: {}]
  %s3 = inlined_call_operand.vmem [shape: f32[8,1], index: 3, kind: output, shape index: {}]
  %s4 = sld [smem:[#allocation0]]
  $region22: #{predictor_binary_forward.1} parent=0
    _
  %s6 = ssub.s32 1, %s4
  %s7 = scalar_select 0, %s6, %s4
  // Predicated region
  $region2: #{predictor_binary_forward.1} parent=0 // pred_check
    _
  $region3: #{predictor_binary_forward.1} parent=0 // pred_check_branch
    %9 = sbr.rel (0) target = $region5
  $region4: #{predictor_binary_forward.1} parent=0 // pred_region
    _
  $region5: #{predictor_binary_forward.1} parent=0 // pred_fallthru
    _
  // Predicated region
  $region6: #{predictor_binary_forward.1} parent=0 // pred_check
    _
  $region7: #{predictor_binary_forward.1} parent=0 // pred_check_branch
    %11 = sbr.rel (0) target = $region9
  $region8: #{predictor_binary_forward.1} parent=0 // pred_region
    _
  $region9: #{predictor_binary_forward.1} parent=0 // pred_fallthru
    _
  // Predicated region
  $region10: #{predictor_binary_forward.1} parent=0 // pred_check
    _
  $region11: #{predictor_binary_forward.1} parent=0 // pred_check_branch
    %13 = sbr.rel (0) target = $region13
  $region12: #{predictor_binary_forward.1} parent=0 // pred_region
    _
  $region13: #{predictor_binary_forward.1} parent=0 // pred_fallthru
    _
  %v14 = vld [vmem:[%s0] sm:$0xff]
  %v15 = vld [vmem:[%s1] sm:$0xff]
  %v16 = vld [vmem:[%s1 + $0x8] sm:$0xff]
  %v17 = vld [vmem:[%s2] sm:$0x1]
  %v19 = vlaneseq
  %v20 = vshrl.u32 %v19, 7
  %v21 = vsub.s32 0, %v20
  %v22 = vrot.slane %v17, %v21
  %vm24 = vcmask 130048
  %v26 = vsel %vm24, %v14, 0
  %28 = vmatprep.subr.mxu0 0.0
  %29 = vmatpush1.msra.mxu0 %v15
  %30 = vmatprep.subr.mxu0 0.0
  %31 = vmatpush1.msra.mxu0 %v16
  %32 = vmatprep.subr.mxu0 0.0
  %33 = vmatpush1.msra.mxu0 0.0
  %34 = vmatprep.subr.mxu0 0.0
  %35 = vmatpush1.msra.mxu0 0.0
  %36 = vmatprep.subr.mxu0 0.0
  %37 = vmatpush1.msra.mxu0 0.0
  %38 = vmatprep.subr.mxu0 0.0
  %39 = vmatpush1.msra.mxu0 0.0
  %40 = vmatprep.subr.mxu0 0.0
  %41 = vmatpush1.msra.mxu0 0.0
  %42 = vmatprep.subr.mxu0 0.0
  %43 = vmatpush1.msra.mxu0 0.0
  %44 = vmatprep.subr.mxu0 0.0
  %45 = vmatpush1.msra.mxu0 0.0
  %46 = vmatprep.subr.mxu0 0.0
  %47 = vmatpush1.msra.mxu0 0.0
  %48 = vmatprep.subr.mxu0 0.0
  %49 = vmatpush1.msra.mxu0 0.0
  %50 = vmatprep.subr.mxu0 0.0
  %51 = vmatpush1.msra.mxu0 0.0
  %52 = vmatprep.subr.mxu0 0.0
  %53 = vmatpush1.msra.mxu0 0.0
  %54 = vmatprep.subr.mxu0 0.0
  %55 = vmatpush1.msra.mxu0 0.0
  %56 = vmatprep.subr.mxu0 0.0
  %57 = vmatpush1.msra.mxu0 0.0
  %58 = vmatprep.subr.mxu0 0.0
  %59 = vmatpush1.msra.mxu0 0.0
  %60 = vmatprep.subr.mxu0 0.0
  %61 = vmatpush1.msra.mxu0 0.0
  %62 = vmatprep.subr.mxu0 0.0
  %63 = vmatpush1.msra.mxu0 0.0
  %64 = vmatprep.subr.mxu0 0.0
  %65 = vmatpush1.msra.mxu0 0.0
  %66 = vmatprep.subr.mxu0 0.0
  %67 = vmatpush1.msra.mxu0 0.0
  %68 = vmatprep.subr.mxu0 0.0
  %69 = vmatpush1.msra.mxu0 0.0
  %70 = vmatprep.subr.mxu0 0.0
  %71 = vmatpush1.msra.mxu0 0.0
  %72 = vmatprep.subr.mxu0 0.0
  %73 = vmatpush1.msra.mxu0 0.0
  %74 = vmatprep.subr.mxu0 0.0
  %75 = vmatpush1.msra.mxu0 0.0
  %76 = vmatprep.subr.mxu0 0.0
  %77 = vmatpush1.msra.mxu0 0.0
  %78 = vmatprep.subr.mxu0 0.0
  %79 = vmatpush1.msra.mxu0 0.0
  %80 = vmatprep.subr.mxu0 0.0
  %81 = vmatpush1.msra.mxu0 0.0
  %82 = vmatprep.subr.mxu0 0.0
  %83 = vmatpush1.msra.mxu0 0.0
  %84 = vmatprep.subr.mxu0 0.0
  %85 = vmatpush1.msra.mxu0 0.0
  %86 = vmatprep.subr.mxu0 0.0
  %87 = vmatpush1.msra.mxu0 0.0
  %88 = vmatprep.subr.mxu0 0.0
  %89 = vmatpush1.msra.mxu0 0.0
  %90 = vmatprep.subr.mxu0 0.0
  %91 = vmatpush1.msra.mxu0 0.0
  %92 = vmatprep.mubr.f32.mxu0 0.0
  %93 = vmatmul.mubr.f32.gmra.mrb[0].mxu0 %v26
  %v94 = vpop.f32.mrb[0].mxu0
  %v95 = vadd.f32 %v22, %v94
  %v96 = vpop.f32.mrb[0].mxu0
  %97 = vdwg.mxu0
  %v98 = vmax.f32 %v95, 0.0
  %s99 = scalar_lea.vmem %s1, 16
  %v100 = vld [vmem:[%s99] sm:$0xff]
  %v101 = vld [vmem:[%s99 + $0x8] sm:$0xff]
  %s102 = scalar_lea.vmem %s2, 1
  %v103 = vld [vmem:[%s102] sm:$0x1]
  %v105 = vlaneseq
  %v106 = vshrl.u32 %v105, 7
  %v107 = vsub.s32 0, %v106
  %v108 = vrot.slane %v103, %v107
  %v111 = vsel %vm24, %v98, 0
  %113 = vmatprep.subr.mxu0 0.0
  %114 = vmatpush1.msra.mxu0 %v100
  %115 = vmatprep.subr.mxu0 0.0
  %116 = vmatpush1.msra.mxu0 %v101
  %117 = vmatprep.subr.mxu0 0.0
  %118 = vmatpush1.msra.mxu0 0.0
  %119 = vmatprep.subr.mxu0 0.0
  %120 = vmatpush1.msra.mxu0 0.0
  %121 = vmatprep.subr.mxu0 0.0
  %122 = vmatpush1.msra.mxu0 0.0
  %123 = vmatprep.subr.mxu0 0.0
  %124 = vmatpush1.msra.mxu0 0.0
  %125 = vmatprep.subr.mxu0 0.0
  %126 = vmatpush1.msra.mxu0 0.0
  %127 = vmatprep.subr.mxu0 0.0
  %128 = vmatpush1.msra.mxu0 0.0
  %129 = vmatprep.subr.mxu0 0.0
  %130 = vmatpush1.msra.mxu0 0.0
  %131 = vmatprep.subr.mxu0 0.0
  %132 = vmatpush1.msra.mxu0 0.0
  %133 = vmatprep.subr.mxu0 0.0
  %134 = vmatpush1.msra.mxu0 0.0
  %135 = vmatprep.subr.mxu0 0.0
  %136 = vmatpush1.msra.mxu0 0.0
  %137 = vmatprep.subr.mxu0 0.0
  %138 = vmatpush1.msra.mxu0 0.0
  %139 = vmatprep.subr.mxu0 0.0
  %140 = vmatpush1.msra.mxu0 0.0
  %141 = vmatprep.subr.mxu0 0.0
  %142 = vmatpush1.msra.mxu0 0.0
  %143 = vmatprep.subr.mxu0 0.0
  %144 = vmatpush1.msra.mxu0 0.0
  %145 = vmatprep.subr.mxu0 0.0
  %146 = vmatpush1.msra.mxu0 0.0
  %147 = vmatprep.subr.mxu0 0.0
  %148 = vmatpush1.msra.mxu0 0.0
  %149 = vmatprep.subr.mxu0 0.0
  %150 = vmatpush1.msra.mxu0 0.0
  %151 = vmatprep.subr.mxu0 0.0
  %152 = vmatpush1.msra.mxu0 0.0
  %153 = vmatprep.subr.mxu0 0.0
  %154 = vmatpush1.msra.mxu0 0.0
  %155 = vmatprep.subr.mxu0 0.0
  %156 = vmatpush1.msra.mxu0 0.0
  %157 = vmatprep.subr.mxu0 0.0
  %158 = vmatpush1.msra.mxu0 0.0
  %159 = vmatprep.subr.mxu0 0.0
  %160 = vmatpush1.msra.mxu0 0.0
  %161 = vmatprep.subr.mxu0 0.0
  %162 = vmatpush1.msra.mxu0 0.0
  %163 = vmatprep.subr.mxu0 0.0
  %164 = vmatpush1.msra.mxu0 0.0
  %165 = vmatprep.subr.mxu0 0.0
  %166 = vmatpush1.msra.mxu0 0.0
  %167 = vmatprep.subr.mxu0 0.0
  %168 = vmatpush1.msra.mxu0 0.0
  %169 = vmatprep.subr.mxu0 0.0
  %170 = vmatpush1.msra.mxu0 0.0
  %171 = vmatprep.subr.mxu0 0.0
  %172 = vmatpush1.msra.mxu0 0.0
  %173 = vmatprep.subr.mxu0 0.0
  %174 = vmatpush1.msra.mxu0 0.0
  %175 = vmatprep.subr.mxu0 0.0
  %176 = vmatpush1.msra.mxu0 0.0
  %177 = vmatprep.mubr.f32.mxu0 0.0
  %178 = vmatmul.mubr.f32.gmra.mrb[0].mxu0 %v111
  %v179 = vpop.f32.mrb[0].mxu0
  %v180 = vadd.f32 %v108, %v179
  %v181 = vpop.f32.mrb[0].mxu0
  %182 = vdwg.mxu0
  %v183 = vmax.f32 %v180, 0.0
  %s184 = scalar_lea.vmem %s1, 32
  %v185 = vld [vmem:[%s184] sm:$0xff]
  %v186 = vld [vmem:[%s184 + $0x8] sm:$0xff]
  %s187 = scalar_lea.vmem %s2, 2
  %v188 = vld [vmem:[%s187] sm:$0x1]
  %v190 = vlaneseq
  %v191 = vshrl.u32 %v190, 7
  %v192 = vsub.s32 0, %v191
  %v193 = vrot.slane %v188, %v192
  %v196 = vsel %vm24, %v183, 0
  %198 = vmatprep.subr.mxu0 0.0
  %199 = vmatpush1.msra.mxu0 %v185
  %200 = vmatprep.subr.mxu0 0.0
  %201 = vmatpush1.msra.mxu0 %v186
  %202 = vmatprep.subr.mxu0 0.0
  %203 = vmatpush1.msra.mxu0 0.0
  %204 = vmatprep.subr.mxu0 0.0
  %205 = vmatpush1.msra.mxu0 0.0
  %206 = vmatprep.subr.mxu0 0.0
  %207 = vmatpush1.msra.mxu0 0.0
  %208 = vmatprep.subr.mxu0 0.0
  %209 = vmatpush1.msra.mxu0 0.0
  %210 = vmatprep.subr.mxu0 0.0
  %211 = vmatpush1.msra.mxu0 0.0
  %212 = vmatprep.subr.mxu0 0.0
  %213 = vmatpush1.msra.mxu0 0.0
  %214 = vmatprep.subr.mxu0 0.0
  %215 = vmatpush1.msra.mxu0 0.0
  %216 = vmatprep.subr.mxu0 0.0
  %217 = vmatpush1.msra.mxu0 0.0
  %218 = vmatprep.subr.mxu0 0.0
  %219 = vmatpush1.msra.mxu0 0.0
  %220 = vmatprep.subr.mxu0 0.0
  %221 = vmatpush1.msra.mxu0 0.0
  %222 = vmatprep.subr.mxu0 0.0
  %223 = vmatpush1.msra.mxu0 0.0
  %224 = vmatprep.subr.mxu0 0.0
  %225 = vmatpush1.msra.mxu0 0.0
  %226 = vmatprep.subr.mxu0 0.0
  %227 = vmatpush1.msra.mxu0 0.0
  %228 = vmatprep.subr.mxu0 0.0
  %229 = vmatpush1.msra.mxu0 0.0
  %230 = vmatprep.subr.mxu0 0.0
  %231 = vmatpush1.msra.mxu0 0.0
  %232 = vmatprep.subr.mxu0 0.0
  %233 = vmatpush1.msra.mxu0 0.0
  %234 = vmatprep.subr.mxu0 0.0
  %235 = vmatpush1.msra.mxu0 0.0
  %236 = vmatprep.subr.mxu0 0.0
  %237 = vmatpush1.msra.mxu0 0.0
  %238 = vmatprep.subr.mxu0 0.0
  %239 = vmatpush1.msra.mxu0 0.0
  %240 = vmatprep.subr.mxu0 0.0
  %241 = vmatpush1.msra.mxu0 0.0
  %242 = vmatprep.subr.mxu0 0.0
  %243 = vmatpush1.msra.mxu0 0.0
  %244 = vmatprep.subr.mxu0 0.0
  %245 = vmatpush1.msra.mxu0 0.0
  %246 = vmatprep.subr.mxu0 0.0
  %247 = vmatpush1.msra.mxu0 0.0
  %248 = vmatprep.subr.mxu0 0.0
  %249 = vmatpush1.msra.mxu0 0.0
  %250 = vmatprep.subr.mxu0 0.0
  %251 = vmatpush1.msra.mxu0 0.0
  %252 = vmatprep.subr.mxu0 0.0
  %253 = vmatpush1.msra.mxu0 0.0
  %254 = vmatprep.subr.mxu0 0.0
  %255 = vmatpush1.msra.mxu0 0.0
  %256 = vmatprep.subr.mxu0 0.0
  %257 = vmatpush1.msra.mxu0 0.0
  %258 = vmatprep.subr.mxu0 0.0
  %259 = vmatpush1.msra.mxu0 0.0
  %260 = vmatprep.subr.mxu0 0.0
  %261 = vmatpush1.msra.mxu0 0.0
  %262 = vmatprep.mubr.f32.mxu0 0.0
  %263 = vmatmul.mubr.f32.gmra.mrb[0].mxu0 %v196
  %v264 = vpop.f32.mrb[0].mxu0
  %v265 = vadd.f32 %v193, %v264
  %v266 = vpop.f32.mrb[0].mxu0
  %267 = vdwg.mxu0
  %v268 = vmax.f32 %v265, 0.0
  %s269 = scalar_lea.vmem %s1, 48
  %v270 = vld [vmem:[%s269] sm:$0xff]
  %v271 = vld [vmem:[%s269 + $0x8] sm:$0xff]
  %s272 = scalar_lea.vmem %s2, 3
  %v273 = vld [vmem:[%s272] sm:$0x1]
  %v275 = vlaneseq
  %v276 = vshrl.u32 %v275, 7
  %v277 = vsub.s32 0, %v276
  %v278 = vrot.slane %v273, %v277
  %v281 = vsel %vm24, %v268, 0
  %283 = vmatprep.subr.mxu0 0.0
  %284 = vmatpush1.msra.mxu0 %v270
  %285 = vmatprep.subr.mxu0 0.0
  %286 = vmatpush1.msra.mxu0 %v271
  %287 = vmatprep.subr.mxu0 0.0
  %288 = vmatpush1.msra.mxu0 0.0
  %289 = vmatprep.subr.mxu0 0.0
  %290 = vmatpush1.msra.mxu0 0.0
  %291 = vmatprep.subr.mxu0 0.0
  %292 = vmatpush1.msra.mxu0 0.0
  %293 = vmatprep.subr.mxu0 0.0
  %294 = vmatpush1.msra.mxu0 0.0
  %295 = vmatprep.subr.mxu0 0.0
  %296 = vmatpush1.msra.mxu0 0.0
  %297 = vmatprep.subr.mxu0 0.0
  %298 = vmatpush1.msra.mxu0 0.0
  %299 = vmatprep.subr.mxu0 0.0
  %300 = vmatpush1.msra.mxu0 0.0
  %301 = vmatprep.subr.mxu0 0.0
  %302 = vmatpush1.msra.mxu0 0.0
  %303 = vmatprep.subr.mxu0 0.0
  %304 = vmatpush1.msra.mxu0 0.0
  %305 = vmatprep.subr.mxu0 0.0
  %306 = vmatpush1.msra.mxu0 0.0
  %307 = vmatprep.subr.mxu0 0.0
  %308 = vmatpush1.msra.mxu0 0.0
  %309 = vmatprep.subr.mxu0 0.0
  %310 = vmatpush1.msra.mxu0 0.0
  %311 = vmatprep.subr.mxu0 0.0
  %312 = vmatpush1.msra.mxu0 0.0
  %313 = vmatprep.subr.mxu0 0.0
  %314 = vmatpush1.msra.mxu0 0.0
  %315 = vmatprep.subr.mxu0 0.0
  %316 = vmatpush1.msra.mxu0 0.0
  %317 = vmatprep.subr.mxu0 0.0
  %318 = vmatpush1.msra.mxu0 0.0
  %319 = vmatprep.subr.mxu0 0.0
  %320 = vmatpush1.msra.mxu0 0.0
  %321 = vmatprep.subr.mxu0 0.0
  %322 = vmatpush1.msra.mxu0 0.0
  %323 = vmatprep.subr.mxu0 0.0
  %324 = vmatpush1.msra.mxu0 0.0
  %325 = vmatprep.subr.mxu0 0.0
  %326 = vmatpush1.msra.mxu0 0.0
  %327 = vmatprep.subr.mxu0 0.0
  %328 = vmatpush1.msra.mxu0 0.0
  %329 = vmatprep.subr.mxu0 0.0
  %330 = vmatpush1.msra.mxu0 0.0
  %331 = vmatprep.subr.mxu0 0.0
  %332 = vmatpush1.msra.mxu0 0.0
  %333 = vmatprep.subr.mxu0 0.0
  %334 = vmatpush1.msra.mxu0 0.0
  %335 = vmatprep.subr.mxu0 0.0
  %336 = vmatpush1.msra.mxu0 0.0
  %337 = vmatprep.subr.mxu0 0.0
  %338 = vmatpush1.msra.mxu0 0.0
  %339 = vmatprep.subr.mxu0 0.0
  %340 = vmatpush1.msra.mxu0 0.0
  %341 = vmatprep.subr.mxu0 0.0
  %342 = vmatpush1.msra.mxu0 0.0
  %343 = vmatprep.subr.mxu0 0.0
  %344 = vmatpush1.msra.mxu0 0.0
  %345 = vmatprep.subr.mxu0 0.0
  %346 = vmatpush1.msra.mxu0 0.0
  %347 = vmatprep.mubr.f32.mxu0 0.0
  %348 = vmatmul.mubr.f32.gmra.mrb[0].mxu0 %v281
  %v349 = vpop.f32.mrb[0].mxu0
  %v350 = vadd.f32 %v278, %v349
  %v351 = vpop.f32.mrb[0].mxu0
  %352 = vdwg.mxu0
  %v353 = vxor.u32 %v350, 2147483648
  %v354 = vmul.f32 %v353, 1.442695
  %v355 = vpow.pop %v354
  %v356 = vadd.f32 %v355, 1.0
  %v357 = vrcp.pop %v356
  %v358 = vmul.f32 1.0, %v357
  %vm359 = vcmask 7168
  %360 = vst.msk [vmem:[%s3] sm:$0xff] %vm359, %v358
  // Predicated region
  $region14: #{predictor_binary_forward.1} parent=0 // pred_check
    _
  $region15: #{predictor_binary_forward.1} parent=0 // pred_check_branch
    %362 = sbr.rel (0) target = $region17
  $region16: #{predictor_binary_forward.1} parent=0 // pred_region
    _
  $region17: #{predictor_binary_forward.1} parent=0 // pred_fallthru
    _
  // Predicated region
  $region18: #{predictor_binary_forward.1} parent=0 // pred_check
    _
  $region19: #{predictor_binary_forward.1} parent=0 // pred_check_branch
    %364 = sbr.rel (0) target = $region21
  $region20: #{predictor_binary_forward.1} parent=0 // pred_region
    _
  $region21: #{predictor_binary_forward.1} parent=0 // pred_fallthru
    _

</llo_original>
